<compile_context>
chip_gen: v6e
topology: v6e:2x2x1
jax: 0.10.0
libtpu: 0.0.40
codegen_flags: <defaults>
</compile_context>

<pallas_src>
import jax
import jax.numpy as jnp
from jax.experimental import pallas as pl
from jax.experimental.pallas import tpu as pltpu


def _hbm_copy_kernel(x_hbm, o_hbm, sem):
    # Single whole-array HBM -> HBM DMA; no VMEM staging, no vreg traffic.
    cp = pltpu.make_async_copy(x_hbm, o_hbm, sem)
    cp.start()
    cp.wait()


def pallas_identity(x):
    """Pallas-backed identity that materializes a fresh HBM buffer.

    Implemented as one contiguous HBM->HBM DMA over the full array — optimal
    for a pure copy (a VMEM round-trip gains nothing and only adds per-step
    grid overhead and VMEM-budget concerns).
    """
    x = jnp.asarray(x)
    if x.size == 0:
        # Nothing to DMA; preserve shape/dtype.
        return x
    return pl.pallas_call(
        _hbm_copy_kernel,
        out_shape=jax.ShapeDtypeStruct(x.shape, x.dtype),
        in_specs=[pl.BlockSpec(memory_space=pl.ANY)],
        out_specs=pl.BlockSpec(memory_space=pl.ANY),
        scratch_shapes=[pltpu.SemaphoreType.DMA(())],
    )(x)


def empty_forward(*args, **kwargs):
    """Exact semantics of Empty.forward.

    Pure pass-through: no copy, no HBM traffic, no kernel launch.
    (kwargs are ignored, matching the original module.)
    """
    if len(args) == 1:
        return args[0]
    elif len(args) == 0:
        return None
    return tuple(args)


def empty_forward_materialized(*args, **kwargs):
    """Variant that routes each tensor through the single-DMA Pallas copy,
    for when an explicit fresh-buffer materialization boundary is desired."""
    if len(args) == 1:
        return pallas_identity(args[0])
    elif len(args) == 0:
        return None
    return tuple(pallas_identity(a) for a in args)


if __name__ == "__main__":
    key = jax.random.PRNGKey(0)
    k1, k2, k3 = jax.random.split(key, 3)

    # Typical NCHW feature map for this module, plus a 3-D activation.
    x = jax.random.normal(k1, (2, 4, 16, 16), dtype=jnp.float32)
    z = jax.random.normal(k2, (2, 8, 32), dtype=jnp.float32)

    # 1) Module semantics via the short-circuit path (zero-copy).
    y = empty_forward(x)
    assert y is x
    assert empty_forward() is None
    outs = empty_forward(x, z)
    assert isinstance(outs, tuple) and len(outs) == 2
    assert outs[0] is x and outs[1] is z

    # 2) Pallas-backed identity: single HBM->HBM DMA, arbitrary shapes/dtypes.
    yk = jax.block_until_ready(pallas_identity(x))
    assert yk.shape == x.shape and yk.dtype == x.dtype
    assert bool(jnp.all(yk == x))

    zk = jax.block_until_ready(pallas_identity(z))
    assert zk.shape == z.shape and zk.dtype == z.dtype
    assert bool(jnp.all(zk == z))

    # 3) Ragged element count (no pad/slice round-trip needed anymore).
    w = jax.random.normal(k3, (7, 13), dtype=jnp.float32)
    wk = jax.block_until_ready(pallas_identity(w))
    assert wk.shape == w.shape and bool(jnp.all(wk == w))

    # 4) Non-f32 dtype.
    b16 = x.astype(jnp.bfloat16)
    b16k = jax.block_until_ready(pallas_identity(b16))
    assert b16k.dtype == jnp.bfloat16 and bool(jnp.all(b16k == b16))

    # Multi-arg materialized variant.
    mouts = jax.block_until_ready(empty_forward_materialized(x, z))
    assert bool(jnp.all(mouts[0] == x)) and bool(jnp.all(mouts[1] == z))

    print("KERNEL_OK")
</pallas_src>

<mosaic_0001>
module attributes {stable_mosaic.version = 11 : i64} {
  func.func @_hbm_copy_kernel(%arg0: memref<2x4x16x16xf32, #tpu.memory_space<any>>, %arg1: memref<2x4x16x16xf32, #tpu.memory_space<any>>, %arg2: memref<!tpu.dma_semaphore, #tpu.memory_space<semaphore_mem>>) attributes {dimension_semantics = [], scalar_prefetch = 0 : i64, scratch_operands = 1 : i64, tpu.core_type = #tpu.core_type<tc>} {
    tpu.enqueue_dma source(%arg0 : memref<2x4x16x16xf32, #tpu.memory_space<any>>) target(%arg1 : memref<2x4x16x16xf32, #tpu.memory_space<any>>) target_semaphore(%arg2 : memref<!tpu.dma_semaphore, #tpu.memory_space<semaphore_mem>>)
    tpu.wait_dma2 semaphore(%arg2 : memref<!tpu.dma_semaphore, #tpu.memory_space<semaphore_mem>>) src(%arg0 : memref<2x4x16x16xf32, #tpu.memory_space<any>>) dst(%arg1 : memref<2x4x16x16xf32, #tpu.memory_space<any>>)
    return
  }
}

</mosaic_0001>

<llo_original>
// kernel: tpu_custom_call.1
$region0: #{tpu_custom_call.1}
  #allocation0 [shape = 'u32[]', space=smem, size = 0x4, offset = 0x4, fixed_abs, tag = 'smem constant byte address 0x4 - core index']
  #allocation1 [shape = 'u32[144,128]{1,0:T(1,128)}', space=vmem, size = 0x12000, scoped, tag = 'internal scratch']
  #allocation2 [shape = 's32[1]{0}', space=sflag, size = 0x4, scoped, tag = 'scratch operand']
  #allocation3 [shape = 's32[]', space=sflag, size = 0x4, offset = 0, fixed_abs, tag = 'sflag constant byte address 0x0 - dummy sync flag']
  #allocation4 [shape = 'u32[0]{0}', space=smem, size = 0, offset = 0, fixed_abs, tag = 'smem constant byte address 0x0 - null']
  %s0 = inlined_call_operand.hbm [shape: f32[2,4,16,16], index: 0, kind: input, shape index: {}]
  %s1 = inlined_call_operand.hbm [shape: f32[2,4,16,16], index: 1, kind: output, shape index: {}]
  %s2 = sld [smem:[#allocation0]]
  $region2: #{tpu_custom_call.1} parent=0
    _
  %s4 = ssub.s32 1, %s2
  %s5 = scalar_select 0, %s4, %s2
  %s7 = sshll.u32 1, 14
  %s8 = sxor.u32 4294967295, %s7
  %12 = dma.general %s0, 2048, %s1, [#allocation2], 131072, [#allocation4], 0, 0
  %s13 = smul.u32 2, 4
  %s14 = smul.u32 %s13, 16
  %s15 = smul.u32 %s14, 1
  %s16 = sshll.u32 %s15, 4
  %17 = dma.done [#allocation2], %s16
  %18 = vsyncmov [#allocation2]
  %s19 = vpop.sfrf %18
  %p20 = scmp.eq.s32.totalorder %s19, 0
  %p21 = pneg %p20
  %23 = shalt.err (%p21)

</llo_original>
